<compile_context>
chip_gen: v7x
topology: tpu7x:2x2x1
jax: 0.10.0
libtpu: 0.0.40
codegen_flags: <defaults>
</compile_context>

<pallas_src>
import numpy as np
import jax
import jax.numpy as jnp
from jax import lax
from jax.experimental import pallas as pl
from jax.experimental.pallas import tpu as pltpu

EMBED_DIM = 44                       # module's embed_dim
NUM_FEATURES = 11                    # include_time_of_day=False
D = EMBED_DIM // NUM_FEATURES        # per-feature embedding width (= 4)
OUT_DIM = 6 * D                      # concat of 6 feature embeddings (= 24)
FEAT_DIM = 32                        # expanded feature-vector width (in-kernel)
COMPACT_DIM = 8                      # compact on-the-wire row width (32 B/row)

BASE_DATE_NP = np.datetime64("2021-01-01", "D")


# --------------------------------------------------------------------------
# Host-side calendar feature extraction (vectorized numpy datetime64).
# TODO(synk): datetime/pandas calendar decoding has no Pallas equivalent; it
# stays on host (but vectorized, not the per-element Python loop of the ref).
# --------------------------------------------------------------------------
def _extract_calendar_features(day_indices):
    flat = np.asarray(day_indices).reshape(-1).astype(np.int64)
    dates = BASE_DATE_NP + flat                             # datetime64[D]
    epoch_days = dates.astype(np.int64)
    dow = ((epoch_days + 3) % 7).astype(np.int32)           # Monday = 0
    months = dates.astype("datetime64[M]")
    month0 = (months.astype(np.int64) % 12).astype(np.int32)
    dom = ((dates - months.astype("datetime64[D]")).astype(np.int64) + 1
           ).astype(np.float32)
    years = dates.astype("datetime64[Y]")
    doy = ((dates - years.astype("datetime64[D]")).astype(np.int64) + 1
           ).astype(np.float32)
    quarter = (month0 // 3).astype(np.int32)

    nxt = dates + np.timedelta64(1, "D")
    n_months = nxt.astype("datetime64[M]")
    n_dom = (nxt - n_months.astype("datetime64[D]")).astype(np.int64) + 1
    n_month0 = n_months.astype(np.int64) % 12
    n_doy = (nxt - nxt.astype("datetime64[Y]").astype("datetime64[D]")
             ).astype(np.int64) + 1

    is_ms = dom == 1.0
    is_me = n_dom == 1
    is_qs = is_ms & (month0 % 3 == 0)
    is_qe = (n_dom == 1) & (n_month0 % 3 == 0)
    is_ys = doy == 1.0
    is_ye = n_doy == 1
    binary = np.stack([is_ms, is_me, is_qs, is_qe, is_ys, is_ye],
                      axis=-1).astype(np.float32)
    return dow, dom, doy, month0, quarter, binary


def _pack_compact(day_indices):
    """Pack per-row features into one compact (n, 8) f32 matrix (32 B/row)."""
    dow, dom, doy, month, quarter, binary = _extract_calendar_features(day_indices)
    n = dow.shape[0]
    feat = np.zeros((n, COMPACT_DIM), np.float32)
    feat[:, 0] = dow                                           # 0..6  (exact f32)
    feat[:, 1] = month                                         # 0..11
    feat[:, 2] = quarter                                       # 0..3
    feat[:, 3] = binary @ (2.0 ** np.arange(6)).astype(np.float32)  # 6-bit mask
    feat[:, 4] = dom                                           # 1..31 (exact f32)
    feat[:, 5] = doy                                           # 1..366 (exact f32)
    # cols 6,7 unused (keep row width a multiple of 8 floats)
    return feat


# --------------------------------------------------------------------------
# Parameters (deterministic init; shapes follow the module's __init__).
# Linear weights are stored pre-transposed: W.T of torch's (out, in).
# --------------------------------------------------------------------------
def init_params(key):
    ks = jax.random.split(key, 9)
    dow_tab = jax.random.normal(ks[0], (7, D), jnp.float32)
    month_tab = jax.random.normal(ks[1], (12, D), jnp.float32)
    quarter_tab = jax.random.normal(ks[2], (4, D), jnp.float32)
    dom_w = jax.random.normal(ks[3], (1, D), jnp.float32) * 0.1
    dom_b = jax.random.normal(ks[4], (1, D), jnp.float32) * 0.1
    doy_w = jax.random.normal(ks[5], (1, D), jnp.float32) * 0.1
    doy_b = jax.random.normal(ks[6], (1, D), jnp.float32) * 0.1
    bin_w = jax.random.normal(ks[7], (6, 6 * D), jnp.float32) * 0.1
    bin_b = jax.random.normal(ks[8], (1, 6 * D), jnp.float32) * 0.1
    return (dow_tab, month_tab, quarter_tab,
            dom_w, dom_b, doy_w, doy_b, bin_w, bin_b)


def build_fused_weight(params):
    """Assemble the single (32, 24) fused weight.

    Call ONCE per parameter set and reuse (it syncs params to host); it is
    deliberately kept out of calendar_time_encode's per-call path.
    """
    (dow_tab, month_tab, quarter_tab,
     dom_w, dom_b, doy_w, doy_b, bin_w, bin_b) = [np.asarray(p, np.float32)
                                                  for p in params]
    w = np.zeros((FEAT_DIM, OUT_DIM), np.float32)
    # Output column layout (matches torch concat order):
    #   [dow 0:D | dom D:2D | doy 2D:3D | month 3D:4D | quarter 4D:5D | bin 5D:6D]
    w[0:7, 0 * D:1 * D] = dow_tab
    w[7:19, 3 * D:4 * D] = month_tab
    w[19:23, 4 * D:5 * D] = quarter_tab
    w[23, 1 * D:2 * D] = dom_w[0]
    w[24, 2 * D:3 * D] = doy_w[0]
    w[25:31, 5 * D:6 * D] = bin_w.reshape(6, 6, D).sum(axis=1)   # pre-summed groups
    # bias column (in-kernel feature col 31 is the constant 1)
    w[31, 1 * D:2 * D] = dom_b[0]
    w[31, 2 * D:3 * D] = doy_b[0]
    w[31, 5 * D:6 * D] = bin_b.reshape(6, D).sum(axis=0)
    return jnp.asarray(w)


# --------------------------------------------------------------------------
# Pallas kernel: expand compact rows -> (bn, 32) features (VPU, free under the
# DMA bound), then one MXU matmul + one full-width store per row block.
# --------------------------------------------------------------------------
def fused_calendar_kernel(feat_ref, w_ref, out_ref):
    f = feat_ref[...]                                  # (bn, 8) f32 compact rows
    dow = f[:, 0:1]
    month = f[:, 1:2]
    quarter = f[:, 2:3]
    flags = f[:, 3:4]
    dom = f[:, 4:5]
    doy = f[:, 5:6]

    rows = f.shape[0]
    col = lax.broadcasted_iota(jnp.int32, (rows, FEAT_DIM), 1).astype(jnp.float32)

    # one-hot regions: dow -> cols 0:7, month -> cols 7:19, quarter -> cols 19:23
    feat32 = jnp.logical_or(
        jnp.logical_or(col == dow, col == month + 7.0),
        col == quarter + 19.0).astype(jnp.float32)
    # value columns: day-of-month (23), day-of-year (24) — kept in exact f32
    feat32 = feat32 + jnp.where(col == 23.0, dom, 0.0)
    feat32 = feat32 + jnp.where(col == 24.0, doy, 0.0)
    # 6 binary flags from the bitmask -> cols 25:31 (scalar-constant math only)
    for k in range(6):
        b = jnp.floor(flags * (1.0 / float(2 ** k)))
        bit = b - 2.0 * jnp.floor(b * 0.5)             # b mod 2, exact in f32
        feat32 = feat32 + jnp.where(col == 25.0 + float(k), bit, 0.0)
    # constant-1 bias column (31)
    feat32 = feat32 + (col == 31.0).astype(jnp.float32)

    out_ref[...] = jnp.dot(feat32, w_ref[...],
                           preferred_element_type=jnp.float32,
                           precision=lax.Precision.HIGHEST)


def _round_up(x, m):
    return -(-x // m) * m


_BN_CAP = 8192   # lane-padded, double-buffered in/out tiles at bn=8192 ~ 16 MiB


def _choose_blocking(n):
    """Pick (row_block, padded_rows): minimal padding, block <= 8192, mult of 8."""
    n8 = _round_up(max(n, 8), 8)
    if n8 <= _BN_CAP:
        return n8, n8                      # single block, <= 7 rows of padding
    pad, neg_bn = min((_round_up(n8, bn), -bn)
                      for bn in (8192, 6144, 4096, 3072, 2048, 1024))
    return -neg_bn, pad


def calendar_time_encode(day_indices, w_fused):
    """Forward pass. `w_fused` must be the prebuilt (32, 24) fused weight."""
    idx_host = np.asarray(jax.device_get(day_indices))
    orig_shape = tuple(idx_host.shape)

    feat_np = _pack_compact(idx_host)                  # (n, 8) f32, 32 B/row
    n = feat_np.shape[0]

    bn, n_pad = _choose_blocking(n)
    if n_pad != n:
        feat_np = np.pad(feat_np, ((0, n_pad - n), (0, 0)))
    feat = jnp.asarray(feat_np)

    out = pl.pallas_call(
        fused_calendar_kernel,
        out_shape=jax.ShapeDtypeStruct((n_pad, OUT_DIM), jnp.float32),
        grid_spec=pltpu.PrefetchScalarGridSpec(
            num_scalar_prefetch=0,
            grid=(n_pad // bn,),
            in_specs=[
                pl.BlockSpec((bn, COMPACT_DIM), lambda i: (i, 0)),
                # constant index_map -> weight DMA'd once, resident in VMEM
                pl.BlockSpec((FEAT_DIM, OUT_DIM), lambda i: (0, 0)),
            ],
            out_specs=pl.BlockSpec((bn, OUT_DIM), lambda i: (i, 0)),
        ),
        compiler_params=pltpu.CompilerParams(
            dimension_semantics=("parallel",),
            vmem_limit_bytes=32 * 1024 * 1024),
    )(feat, w_fused)

    if n_pad != n:
        out = out[:n]
    return out.reshape(*orig_shape, OUT_DIM)


# --------------------------------------------------------------------------
# Pure-numpy reference (original module math, un-fused) for a sanity check.
# --------------------------------------------------------------------------
def calendar_time_encode_ref(day_indices, params):
    orig_shape = tuple(np.asarray(jax.device_get(day_indices)).shape)
    dow, dom, doy, month, quarter, binary = _extract_calendar_features(
        jax.device_get(day_indices))
    (dow_tab, month_tab, quarter_tab,
     dom_w, dom_b, doy_w, doy_b, bin_w, bin_b) = [np.asarray(p, np.float32)
                                                  for p in params]
    n = dow.shape[0]
    dow_e = dow_tab[dow]
    month_e = month_tab[month]
    quarter_e = quarter_tab[quarter]
    dom_e = dom.reshape(n, 1) * dom_w + dom_b
    doy_e = doy.reshape(n, 1) * doy_w + doy_b
    bin_full = binary @ bin_w + bin_b
    bin_e = bin_full.reshape(n, 6, D).sum(axis=1)
    out = np.concatenate([dow_e, dom_e, doy_e, month_e, quarter_e, bin_e], axis=-1)
    return out.reshape(*orig_shape, OUT_DIM).astype(np.float32)


if __name__ == "__main__":
    key = jax.random.PRNGKey(0)
    k_idx, k_idx2, k_idx3, k_param = jax.random.split(key, 4)
    params = init_params(k_param)
    # Fused (32, 24) weight built ONCE (hoisted out of the per-call path).
    w_fused = build_fused_weight(params)

    # Small deterministic input: batch of day indices, shape (2, 8).
    day_indices = jax.random.randint(k_idx, (2, 8), 0, 900, dtype=jnp.int32)
    out = jax.block_until_ready(calendar_time_encode(day_indices, w_fused))
    ref = calendar_time_encode_ref(day_indices, params)
    assert out.shape == (2, 8, OUT_DIM), out.shape
    np.testing.assert_allclose(np.asarray(out), ref, rtol=1e-5, atol=1e-4)

    # Single-block path, minimal padding: n = 2100 -> bn = 2104 (4 pad rows).
    day_indices2 = jax.random.randint(k_idx2, (3, 700), 0, 3000, dtype=jnp.int32)
    out2 = jax.block_until_ready(calendar_time_encode(day_indices2, w_fused))
    ref2 = calendar_time_encode_ref(day_indices2, params)
    assert out2.shape == (3, 700, OUT_DIM), out2.shape
    np.testing.assert_allclose(np.asarray(out2), ref2, rtol=1e-5, atol=1e-4)

    # Multi-block path: n = 9000 -> bn = 3072, grid = 3 ("parallel" steps >= 2
    # so both v7x TensorCores get work); exercises adaptive blocking + padding.
    day_indices3 = jax.random.randint(k_idx3, (1, 9000), 0, 3000, dtype=jnp.int32)
    out3 = jax.block_until_ready(calendar_time_encode(day_indices3, w_fused))
    ref3 = calendar_time_encode_ref(day_indices3, params)
    assert out3.shape == (1, 9000, OUT_DIM), out3.shape
    np.testing.assert_allclose(np.asarray(out3), ref3, rtol=1e-5, atol=1e-4)

    print("KERNEL_OK")
</pallas_src>

<mosaic_0001>
module attributes {stable_mosaic.version = 11 : i64} {
  func.func @fused_calendar_kernel(%arg0: i32, %arg1: memref<16x8xf32, #tpu.memory_space<vmem>>, %arg2: memref<32x24xf32, #tpu.memory_space<vmem>>, %arg3: memref<16x24xf32, #tpu.memory_space<vmem>>) attributes {dimension_semantics = [#tpu.dimension_semantics<parallel>], iteration_bounds = array<i64: 1>, scalar_prefetch = 0 : i64, scratch_operands = 0 : i64, tpu.core_type = #tpu.core_type<tc>, window_params = [{transform_indices = @transform_0, window_bounds = array<i64: 16, 8>}, {pipeline_mode = #tpu.pipeline_mode<synchronous>, transform_indices = @transform_1, window_bounds = array<i64: 32, 24>}, {transform_indices = @transform_2, window_bounds = array<i64: 16, 24>}]} {
    %c0 = arith.constant 0 : index
    %c0_0 = arith.constant 0 : index
    %0 = vector.load %arg1[%c0, %c0_0] : memref<16x8xf32, #tpu.memory_space<vmem>>, vector<16x8xf32>
    %1 = vector.extract_strided_slice %0 {offsets = [0, 0], sizes = [16, 1], strides = [1, 1]} : vector<16x8xf32> to vector<16x1xf32>
    %2 = vector.extract_strided_slice %0 {offsets = [0, 1], sizes = [16, 1], strides = [1, 1]} : vector<16x8xf32> to vector<16x1xf32>
    %3 = vector.extract_strided_slice %0 {offsets = [0, 2], sizes = [16, 1], strides = [1, 1]} : vector<16x8xf32> to vector<16x1xf32>
    %4 = vector.extract_strided_slice %0 {offsets = [0, 3], sizes = [16, 1], strides = [1, 1]} : vector<16x8xf32> to vector<16x1xf32>
    %5 = vector.extract_strided_slice %0 {offsets = [0, 4], sizes = [16, 1], strides = [1, 1]} : vector<16x8xf32> to vector<16x1xf32>
    %6 = vector.extract_strided_slice %0 {offsets = [0, 5], sizes = [16, 1], strides = [1, 1]} : vector<16x8xf32> to vector<16x1xf32>
    %7 = tpu.iota {dimensions = array<i32: 1>} : vector<16x32xi32>
    %8 = arith.sitofp %7 : vector<16x32xi32> to vector<16x32xf32>
    %9 = vector.broadcast %1 : vector<16x1xf32> to vector<16x32xf32>
    %10 = arith.cmpf oeq, %8, %9 : vector<16x32xf32>
    %cst = arith.constant 7.000000e+00 : f32
    %11 = vector.broadcast %cst : f32 to vector<16x1xf32>
    %12 = arith.addf %2, %11 : vector<16x1xf32>
    %13 = vector.broadcast %12 : vector<16x1xf32> to vector<16x32xf32>
    %14 = arith.cmpf oeq, %8, %13 : vector<16x32xf32>
    %15 = arith.ori %10, %14 : vector<16x32xi1>
    %cst_1 = arith.constant 1.900000e+01 : f32
    %16 = vector.broadcast %cst_1 : f32 to vector<16x1xf32>
    %17 = arith.addf %3, %16 : vector<16x1xf32>
    %18 = vector.broadcast %17 : vector<16x1xf32> to vector<16x32xf32>
    %19 = arith.cmpf oeq, %8, %18 : vector<16x32xf32>
    %20 = arith.ori %15, %19 : vector<16x32xi1>
    %21 = arith.extui %20 : vector<16x32xi1> to vector<16x32xi32>
    %22 = arith.sitofp %21 : vector<16x32xi32> to vector<16x32xf32>
    %cst_2 = arith.constant 2.300000e+01 : f32
    %23 = vector.broadcast %cst_2 : f32 to vector<16x32xf32>
    %24 = arith.cmpf oeq, %8, %23 : vector<16x32xf32>
    %cst_3 = arith.constant 0.000000e+00 : f32
    %25 = vector.shape_cast %5 : vector<16x1xf32> to vector<16x1xf32>
    %26 = vector.broadcast %25 : vector<16x1xf32> to vector<16x32xf32>
    %27 = vector.broadcast %cst_3 : f32 to vector<16x32xf32>
    %28 = arith.select %24, %26, %27 : vector<16x32xi1>, vector<16x32xf32>
    %29 = arith.addf %22, %28 : vector<16x32xf32>
    %cst_4 = arith.constant 2.400000e+01 : f32
    %30 = vector.broadcast %cst_4 : f32 to vector<16x32xf32>
    %31 = arith.cmpf oeq, %8, %30 : vector<16x32xf32>
    %cst_5 = arith.constant 0.000000e+00 : f32
    %32 = vector.shape_cast %6 : vector<16x1xf32> to vector<16x1xf32>
    %33 = vector.broadcast %32 : vector<16x1xf32> to vector<16x32xf32>
    %34 = vector.broadcast %cst_5 : f32 to vector<16x32xf32>
    %35 = arith.select %31, %33, %34 : vector<16x32xi1>, vector<16x32xf32>
    %36 = arith.addf %29, %35 : vector<16x32xf32>
    %cst_6 = arith.constant 1.000000e+00 : f32
    %37 = vector.broadcast %cst_6 : f32 to vector<16x1xf32>
    %38 = arith.mulf %4, %37 : vector<16x1xf32>
    %39 = math.floor %38 : vector<16x1xf32>
    %cst_7 = arith.constant 5.000000e-01 : f32
    %40 = vector.broadcast %cst_7 : f32 to vector<16x1xf32>
    %41 = arith.mulf %39, %40 : vector<16x1xf32>
    %42 = math.floor %41 : vector<16x1xf32>
    %cst_8 = arith.constant 2.000000e+00 : f32
    %43 = vector.broadcast %cst_8 : f32 to vector<16x1xf32>
    %44 = arith.mulf %43, %42 : vector<16x1xf32>
    %45 = arith.subf %39, %44 : vector<16x1xf32>
    %cst_9 = arith.constant 2.500000e+01 : f32
    %46 = vector.broadcast %cst_9 : f32 to vector<16x32xf32>
    %47 = arith.cmpf oeq, %8, %46 : vector<16x32xf32>
    %cst_10 = arith.constant 0.000000e+00 : f32
    %48 = vector.shape_cast %45 : vector<16x1xf32> to vector<16x1xf32>
    %49 = vector.broadcast %48 : vector<16x1xf32> to vector<16x32xf32>
    %50 = vector.broadcast %cst_10 : f32 to vector<16x32xf32>
    %51 = arith.select %47, %49, %50 : vector<16x32xi1>, vector<16x32xf32>
    %52 = arith.addf %36, %51 : vector<16x32xf32>
    %cst_11 = arith.constant 5.000000e-01 : f32
    %53 = vector.broadcast %cst_11 : f32 to vector<16x1xf32>
    %54 = arith.mulf %4, %53 : vector<16x1xf32>
    %55 = math.floor %54 : vector<16x1xf32>
    %cst_12 = arith.constant 5.000000e-01 : f32
    %56 = vector.broadcast %cst_12 : f32 to vector<16x1xf32>
    %57 = arith.mulf %55, %56 : vector<16x1xf32>
    %58 = math.floor %57 : vector<16x1xf32>
    %cst_13 = arith.constant 2.000000e+00 : f32
    %59 = vector.broadcast %cst_13 : f32 to vector<16x1xf32>
    %60 = arith.mulf %59, %58 : vector<16x1xf32>
    %61 = arith.subf %55, %60 : vector<16x1xf32>
    %cst_14 = arith.constant 2.600000e+01 : f32
    %62 = vector.broadcast %cst_14 : f32 to vector<16x32xf32>
    %63 = arith.cmpf oeq, %8, %62 : vector<16x32xf32>
    %cst_15 = arith.constant 0.000000e+00 : f32
    %64 = vector.shape_cast %61 : vector<16x1xf32> to vector<16x1xf32>
    %65 = vector.broadcast %64 : vector<16x1xf32> to vector<16x32xf32>
    %66 = vector.broadcast %cst_15 : f32 to vector<16x32xf32>
    %67 = arith.select %63, %65, %66 : vector<16x32xi1>, vector<16x32xf32>
    %68 = arith.addf %52, %67 : vector<16x32xf32>
    %cst_16 = arith.constant 2.500000e-01 : f32
    %69 = vector.broadcast %cst_16 : f32 to vector<16x1xf32>
    %70 = arith.mulf %4, %69 : vector<16x1xf32>
    %71 = math.floor %70 : vector<16x1xf32>
    %cst_17 = arith.constant 5.000000e-01 : f32
    %72 = vector.broadcast %cst_17 : f32 to vector<16x1xf32>
    %73 = arith.mulf %71, %72 : vector<16x1xf32>
    %74 = math.floor %73 : vector<16x1xf32>
    %cst_18 = arith.constant 2.000000e+00 : f32
    %75 = vector.broadcast %cst_18 : f32 to vector<16x1xf32>
    %76 = arith.mulf %75, %74 : vector<16x1xf32>
    %77 = arith.subf %71, %76 : vector<16x1xf32>
    %cst_19 = arith.constant 2.700000e+01 : f32
    %78 = vector.broadcast %cst_19 : f32 to vector<16x32xf32>
    %79 = arith.cmpf oeq, %8, %78 : vector<16x32xf32>
    %cst_20 = arith.constant 0.000000e+00 : f32
    %80 = vector.shape_cast %77 : vector<16x1xf32> to vector<16x1xf32>
    %81 = vector.broadcast %80 : vector<16x1xf32> to vector<16x32xf32>
    %82 = vector.broadcast %cst_20 : f32 to vector<16x32xf32>
    %83 = arith.select %79, %81, %82 : vector<16x32xi1>, vector<16x32xf32>
    %84 = arith.addf %68, %83 : vector<16x32xf32>
    %cst_21 = arith.constant 1.250000e-01 : f32
    %85 = vector.broadcast %cst_21 : f32 to vector<16x1xf32>
    %86 = arith.mulf %4, %85 : vector<16x1xf32>
    %87 = math.floor %86 : vector<16x1xf32>
    %cst_22 = arith.constant 5.000000e-01 : f32
    %88 = vector.broadcast %cst_22 : f32 to vector<16x1xf32>
    %89 = arith.mulf %87, %88 : vector<16x1xf32>
    %90 = math.floor %89 : vector<16x1xf32>
    %cst_23 = arith.constant 2.000000e+00 : f32
    %91 = vector.broadcast %cst_23 : f32 to vector<16x1xf32>
    %92 = arith.mulf %91, %90 : vector<16x1xf32>
    %93 = arith.subf %87, %92 : vector<16x1xf32>
    %cst_24 = arith.constant 2.800000e+01 : f32
    %94 = vector.broadcast %cst_24 : f32 to vector<16x32xf32>
    %95 = arith.cmpf oeq, %8, %94 : vector<16x32xf32>
    %cst_25 = arith.constant 0.000000e+00 : f32
    %96 = vector.shape_cast %93 : vector<16x1xf32> to vector<16x1xf32>
    %97 = vector.broadcast %96 : vector<16x1xf32> to vector<16x32xf32>
    %98 = vector.broadcast %cst_25 : f32 to vector<16x32xf32>
    %99 = arith.select %95, %97, %98 : vector<16x32xi1>, vector<16x32xf32>
    %100 = arith.addf %84, %99 : vector<16x32xf32>
    %cst_26 = arith.constant 6.250000e-02 : f32
    %101 = vector.broadcast %cst_26 : f32 to vector<16x1xf32>
    %102 = arith.mulf %4, %101 : vector<16x1xf32>
    %103 = math.floor %102 : vector<16x1xf32>
    %cst_27 = arith.constant 5.000000e-01 : f32
    %104 = vector.broadcast %cst_27 : f32 to vector<16x1xf32>
    %105 = arith.mulf %103, %104 : vector<16x1xf32>
    %106 = math.floor %105 : vector<16x1xf32>
    %cst_28 = arith.constant 2.000000e+00 : f32
    %107 = vector.broadcast %cst_28 : f32 to vector<16x1xf32>
    %108 = arith.mulf %107, %106 : vector<16x1xf32>
    %109 = arith.subf %103, %108 : vector<16x1xf32>
    %cst_29 = arith.constant 2.900000e+01 : f32
    %110 = vector.broadcast %cst_29 : f32 to vector<16x32xf32>
    %111 = arith.cmpf oeq, %8, %110 : vector<16x32xf32>
    %cst_30 = arith.constant 0.000000e+00 : f32
    %112 = vector.shape_cast %109 : vector<16x1xf32> to vector<16x1xf32>
    %113 = vector.broadcast %112 : vector<16x1xf32> to vector<16x32xf32>
    %114 = vector.broadcast %cst_30 : f32 to vector<16x32xf32>
    %115 = arith.select %111, %113, %114 : vector<16x32xi1>, vector<16x32xf32>
    %116 = arith.addf %100, %115 : vector<16x32xf32>
    %cst_31 = arith.constant 3.125000e-02 : f32
    %117 = vector.broadcast %cst_31 : f32 to vector<16x1xf32>
    %118 = arith.mulf %4, %117 : vector<16x1xf32>
    %119 = math.floor %118 : vector<16x1xf32>
    %cst_32 = arith.constant 5.000000e-01 : f32
    %120 = vector.broadcast %cst_32 : f32 to vector<16x1xf32>
    %121 = arith.mulf %119, %120 : vector<16x1xf32>
    %122 = math.floor %121 : vector<16x1xf32>
    %cst_33 = arith.constant 2.000000e+00 : f32
    %123 = vector.broadcast %cst_33 : f32 to vector<16x1xf32>
    %124 = arith.mulf %123, %122 : vector<16x1xf32>
    %125 = arith.subf %119, %124 : vector<16x1xf32>
    %cst_34 = arith.constant 3.000000e+01 : f32
    %126 = vector.broadcast %cst_34 : f32 to vector<16x32xf32>
    %127 = arith.cmpf oeq, %8, %126 : vector<16x32xf32>
    %cst_35 = arith.constant 0.000000e+00 : f32
    %128 = vector.shape_cast %125 : vector<16x1xf32> to vector<16x1xf32>
    %129 = vector.broadcast %128 : vector<16x1xf32> to vector<16x32xf32>
    %130 = vector.broadcast %cst_35 : f32 to vector<16x32xf32>
    %131 = arith.select %127, %129, %130 : vector<16x32xi1>, vector<16x32xf32>
    %132 = arith.addf %116, %131 : vector<16x32xf32>
    %cst_36 = arith.constant 3.100000e+01 : f32
    %133 = vector.broadcast %cst_36 : f32 to vector<16x32xf32>
    %134 = arith.cmpf oeq, %8, %133 : vector<16x32xf32>
    %135 = arith.extui %134 : vector<16x32xi1> to vector<16x32xi32>
    %136 = arith.sitofp %135 : vector<16x32xi32> to vector<16x32xf32>
    %137 = arith.addf %132, %136 : vector<16x32xf32>
    %c0_37 = arith.constant 0 : index
    %c0_38 = arith.constant 0 : index
    %138 = vector.load %arg2[%c0_37, %c0_38] : memref<32x24xf32, #tpu.memory_space<vmem>>, vector<32x24xf32>
    %cst_39 = arith.constant dense<0.000000e+00> : vector<16x24xf32>
    %139 = tpu.matmul %137, %138, %cst_39 {dimension_numbers = #tpu.dot_dimension_numbers<[1], [0], [0], [1], [0, 0, 1, 1], [], []>, precision = #tpu.contract_precision<fp32>} : vector<16x32xf32>, vector<32x24xf32>, vector<16x24xf32> -> vector<16x24xf32>
    %c0_40 = arith.constant 0 : index
    %c0_41 = arith.constant 0 : index
    %140 = vector.load %arg3[%c0_40, %c0_41] : memref<16x24xf32, #tpu.memory_space<vmem>>, vector<16x24xf32>
    tpu.vector_store %arg3[%c0_40, %c0_41], %139 {strides = array<i32>} : memref<16x24xf32, #tpu.memory_space<vmem>>, vector<16x24xf32>,
    return
  }
  func.func @transform_0(%arg0: i32) -> (i32, i32) {
    %c0_i32 = arith.constant 0 : i32
    %c0_i32_0 = arith.constant 0 : i32
    return %arg0, %c0_i32 : i32, i32
  }
  func.func @transform_1(%arg0: i32) -> (i32, i32) {
    %c0_i32 = arith.constant 0 : i32
    %c0_i32_0 = arith.constant 0 : i32
    %c0_i32_1 = arith.constant 0 : i32
    return %c0_i32, %c0_i32_0 : i32, i32
  }
  func.func @transform_2(%arg0: i32) -> (i32, i32) {
    %c0_i32 = arith.constant 0 : i32
    %c0_i32_0 = arith.constant 0 : i32
    return %arg0, %c0_i32 : i32, i32
  }
}

</mosaic_0001>

<llo_original>
// kernel: tpu_custom_call.1
$region0: #{tpu_custom_call.1}
  #allocation0 [shape = 'u32[]', space=smem, size = 0x4, offset = 0x4, fixed_abs, tag = 'smem constant byte address 0x4 - core index']
  #allocation1 [shape = 'u32[144,128]{1,0:T(1,128)}', space=vmem, size = 0x12000, scoped, tag = 'internal scratch']
  %s0 = inlined_call_operand.vmem [shape: f32[16,8], index: 0, kind: input, shape index: {}]
  %s1 = inlined_call_operand.vmem [shape: f32[32,24], index: 1, kind: input, shape index: {}]
  %s2 = inlined_call_operand.hbm [shape: f32[16,24], index: 2, kind: output, shape index: {}]
  %s3 = sld [smem:[#allocation0]]
  $region18: #{tpu_custom_call.1} parent=0
    _
  %s5 = ssub.s32 1, %s3
  %s6 = scalar_select 0, %s5, %s3
  $region1: #{tpu_custom_call.1} parent=0
    #allocation2 [shape = 'u8[8192]{0}', space=vmem, size = 0x2000, scoped, tag = 'output window, operand 0, single buffered']
    #allocation3 [shape = 's32[1]{0}', space=sflag, size = 0x4, scoped, tag = 'scoped memory for tpu_custom_call.1']
    %7 = vsyncpa [#allocation3], 0
    // Predicated region
    $region2: #{tpu_custom_call.1} parent=1 // pred_check
      _
    $region3: #{tpu_custom_call.1} parent=1 // pred_check_branch
      %9 = sbr.rel (0) target = $region5
    $region4: #{tpu_custom_call.1} parent=1 // pred_region
      _
    $region5: #{tpu_custom_call.1} parent=1 // pred_fallthru
      _
    // Predicated region
    $region6: #{tpu_custom_call.1} parent=1 // pred_check
      _
    $region7: #{tpu_custom_call.1} parent=1 // pred_check_branch
      %11 = sbr.rel (0) target = $region9
    $region8: #{tpu_custom_call.1} parent=1 // pred_region
      _
    $region9: #{tpu_custom_call.1} parent=1 // pred_fallthru
      _
    %v12 = vld [vmem:[%s0] sm:$0xff]
    %v13 = vld [vmem:[%s0 + $0x8] sm:$0xff]
    %v14 = vlaneseq
    %v15 = vand.u32 %v14, 127
    %v16 = vcvt.s32.f32 %v15
    %18 = vset.pattern.permute.xlu0 0
    %19 = vperm.xlu0 %18, %v12
    %v20 = vpop.permute.xlu0 %19
    %23 = vset.pattern.permute.xlu0 0
    %24 = vperm.xlu0 %23, %v13
    %v25 = vpop.permute.xlu0 %24
    %vm27 = vcmp.eq.f32.partialorder %v16, %v20
    %vm28 = vcmp.eq.f32.partialorder %v16, %v25
    %v29 = vadd.f32 %v12, 7.0
    %v30 = vadd.f32 %v13, 7.0
    %32 = vset.pattern.permute.xlu0 1
    %33 = vperm.xlu0 %32, %v29
    %v34 = vpop.permute.xlu0 %33
    %37 = vset.pattern.permute.xlu0 1
    %38 = vperm.xlu0 %37, %v30
    %v39 = vpop.permute.xlu0 %38
    %vm41 = vcmp.eq.f32.partialorder %v16, %v34
    %vm42 = vcmp.eq.f32.partialorder %v16, %v39
    %vm43 = vmor %vm27, %vm41
    %vm44 = vmor %vm28, %vm42
    %v45 = vadd.f32 %v12, 19.0
    %v46 = vadd.f32 %v13, 19.0
    %48 = vset.pattern.permute.xlu0 2
    %49 = vperm.xlu0 %48, %v45
    %v50 = vpop.permute.xlu0 %49
    %53 = vset.pattern.permute.xlu0 2
    %54 = vperm.xlu0 %53, %v46
    %v55 = vpop.permute.xlu0 %54
    %vm57 = vcmp.eq.f32.partialorder %v16, %v50
    %vm58 = vcmp.eq.f32.partialorder %v16, %v55
    %vm59 = vmor %vm43, %vm57
    %vm60 = vmor %vm44, %vm58
    %v61 = vsel %vm59, 1, 0
    %v62 = vsel %vm60, 1, 0
    %v63 = vcvt.s32.f32 %v61
    %v64 = vcvt.s32.f32 %v62
    %vm65 = vcmp.eq.f32.partialorder %v16, 23.0
    %66 = vset.pattern.permute.xlu0 4
    %67 = vperm.xlu0 %66, %v12
    %v68 = vpop.permute.xlu0 %67
    %70 = vset.pattern.permute.xlu0 4
    %71 = vperm.xlu0 %70, %v13
    %v72 = vpop.permute.xlu0 %71
    %v74 = vsel %vm65, %v68, 0.0
    %v75 = vsel %vm65, %v72, 0.0
    %v76 = vadd.f32 %v63, %v74
    %v77 = vadd.f32 %v64, %v75
    %vm78 = vcmp.eq.f32.partialorder %v16, 24.0
    %79 = vset.pattern.permute.xlu0 5
    %80 = vperm.xlu0 %79, %v12
    %v81 = vpop.permute.xlu0 %80
    %83 = vset.pattern.permute.xlu0 5
    %84 = vperm.xlu0 %83, %v13
    %v85 = vpop.permute.xlu0 %84
    %v87 = vsel %vm78, %v81, 0.0
    %v88 = vsel %vm78, %v85, 0.0
    %v89 = vadd.f32 %v76, %v87
    %v90 = vadd.f32 %v77, %v88
    %v91 = vfloor.f32 %v12
    %v92 = vfloor.f32 %v13
    %v93 = vmul.f32 %v91, 0.5
    %v94 = vmul.f32 %v92, 0.5
    %v95 = vfloor.f32 %v93
    %v96 = vfloor.f32 %v94
    %v97 = vmul.f32 %v95, 2.0
    %v98 = vmul.f32 %v96, 2.0
    %v99 = vsub.f32 %v91, %v97
    %v100 = vsub.f32 %v92, %v98
    %vm101 = vcmp.eq.f32.partialorder %v16, 25.0
    %103 = vset.pattern.permute.xlu0 3
    %104 = vperm.xlu0 %103, %v99
    %v105 = vpop.permute.xlu0 %104
    %108 = vset.pattern.permute.xlu0 3
    %109 = vperm.xlu0 %108, %v100
    %v110 = vpop.permute.xlu0 %109
    %v112 = vsel %vm101, %v105, 0.0
    %v113 = vsel %vm101, %v110, 0.0
    %v114 = vadd.f32 %v89, %v112
    %v115 = vadd.f32 %v90, %v113
    %v116 = vmul.f32 %v12, 0.5
    %v117 = vmul.f32 %v13, 0.5
    %v118 = vfloor.f32 %v116
    %v119 = vfloor.f32 %v117
    %v120 = vmul.f32 %v118, 0.5
    %v121 = vmul.f32 %v119, 0.5
    %v122 = vfloor.f32 %v120
    %v123 = vfloor.f32 %v121
    %v124 = vmul.f32 %v122, 2.0
    %v125 = vmul.f32 %v123, 2.0
    %v126 = vsub.f32 %v118, %v124
    %v127 = vsub.f32 %v119, %v125
    %vm128 = vcmp.eq.f32.partialorder %v16, 26.0
    %130 = vset.pattern.permute.xlu0 3
    %131 = vperm.xlu0 %130, %v126
    %v132 = vpop.permute.xlu0 %131
    %135 = vset.pattern.permute.xlu0 3
    %136 = vperm.xlu0 %135, %v127
    %v137 = vpop.permute.xlu0 %136
    %v139 = vsel %vm128, %v132, 0.0
    %v140 = vsel %vm128, %v137, 0.0
    %v141 = vadd.f32 %v114, %v139
    %v142 = vadd.f32 %v115, %v140
    %v143 = vmul.f32 %v12, 0.25
    %v144 = vmul.f32 %v13, 0.25
    %v145 = vfloor.f32 %v143
    %v146 = vfloor.f32 %v144
    %v147 = vmul.f32 %v145, 0.5
    %v148 = vmul.f32 %v146, 0.5
    %v149 = vfloor.f32 %v147
    %v150 = vfloor.f32 %v148
    %v151 = vmul.f32 %v149, 2.0
    %v152 = vmul.f32 %v150, 2.0
    %v153 = vsub.f32 %v145, %v151
    %v154 = vsub.f32 %v146, %v152
    %vm155 = vcmp.eq.f32.partialorder %v16, 27.0
    %157 = vset.pattern.permute.xlu0 3
    %158 = vperm.xlu0 %157, %v153
    %v159 = vpop.permute.xlu0 %158
    %162 = vset.pattern.permute.xlu0 3
    %163 = vperm.xlu0 %162, %v154
    %v164 = vpop.permute.xlu0 %163
    %v166 = vsel %vm155, %v159, 0.0
    %v167 = vsel %vm155, %v164, 0.0
    %v168 = vadd.f32 %v141, %v166
    %v169 = vadd.f32 %v142, %v167
    %v170 = vmul.f32 %v12, 0.125
    %v171 = vmul.f32 %v13, 0.125
    %v172 = vfloor.f32 %v170
    %v173 = vfloor.f32 %v171
    %v174 = vmul.f32 %v172, 0.5
    %v175 = vmul.f32 %v173, 0.5
    %v176 = vfloor.f32 %v174
    %v177 = vfloor.f32 %v175
    %v178 = vmul.f32 %v176, 2.0
    %v179 = vmul.f32 %v177, 2.0
    %v180 = vsub.f32 %v172, %v178
    %v181 = vsub.f32 %v173, %v179
    %vm182 = vcmp.eq.f32.partialorder %v16, 28.0
    %184 = vset.pattern.permute.xlu0 3
    %185 = vperm.xlu0 %184, %v180
    %v186 = vpop.permute.xlu0 %185
    %189 = vset.pattern.permute.xlu0 3
    %190 = vperm.xlu0 %189, %v181
    %v191 = vpop.permute.xlu0 %190
    %v193 = vsel %vm182, %v186, 0.0
    %v194 = vsel %vm182, %v191, 0.0
    %v195 = vadd.f32 %v168, %v193
    %v196 = vadd.f32 %v169, %v194
    %v197 = vmul.f32 %v12, 0.0625
    %v198 = vmul.f32 %v13, 0.0625
    %v199 = vfloor.f32 %v197
    %v200 = vfloor.f32 %v198
    %v201 = vmul.f32 %v199, 0.5
    %v202 = vmul.f32 %v200, 0.5
    %v203 = vfloor.f32 %v201
    %v204 = vfloor.f32 %v202
    %v205 = vmul.f32 %v203, 2.0
    %v206 = vmul.f32 %v204, 2.0
    %v207 = vsub.f32 %v199, %v205
    %v208 = vsub.f32 %v200, %v206
    %vm209 = vcmp.eq.f32.partialorder %v16, 29.0
    %211 = vset.pattern.permute.xlu0 3
    %212 = vperm.xlu0 %211, %v207
    %v213 = vpop.permute.xlu0 %212
    %216 = vset.pattern.permute.xlu0 3
    %217 = vperm.xlu0 %216, %v208
    %v218 = vpop.permute.xlu0 %217
    %v220 = vsel %vm209, %v213, 0.0
    %v221 = vsel %vm209, %v218, 0.0
    %v222 = vadd.f32 %v195, %v220
    %v223 = vadd.f32 %v196, %v221
    %v224 = vmul.f32 %v12, 0.03125
    %v225 = vmul.f32 %v13, 0.03125
    %v226 = vfloor.f32 %v224
    %v227 = vfloor.f32 %v225
    %v228 = vmul.f32 %v226, 0.5
    %v229 = vmul.f32 %v227, 0.5
    %v230 = vfloor.f32 %v228
    %v231 = vfloor.f32 %v229
    %v232 = vmul.f32 %v230, 2.0
    %v233 = vmul.f32 %v231, 2.0
    %v234 = vsub.f32 %v226, %v232
    %v235 = vsub.f32 %v227, %v233
    %vm236 = vcmp.eq.f32.partialorder %v16, 30.0
    %238 = vset.pattern.permute.xlu0 3
    %239 = vperm.xlu0 %238, %v234
    %v240 = vpop.permute.xlu0 %239
    %243 = vset.pattern.permute.xlu0 3
    %244 = vperm.xlu0 %243, %v235
    %v245 = vpop.permute.xlu0 %244
    %v247 = vsel %vm236, %v240, 0.0
    %v248 = vsel %vm236, %v245, 0.0
    %v249 = vadd.f32 %v222, %v247
    %v250 = vadd.f32 %v223, %v248
    %vm251 = vcmp.eq.f32.partialorder %v16, 31.0
    %v252 = vsel %vm251, 1, 0
    %v253 = vcvt.s32.f32 %v252
    %v254 = vadd.f32 %v249, %v253
    %v255 = vadd.f32 %v250, %v253
    %v256 = vld [vmem:[%s1] sm:$0xff]
    %v257 = vld [vmem:[%s1 + $0x8] sm:$0xff]
    %v258 = vld [vmem:[%s1 + $0x10] sm:$0xff]
    %v259 = vld [vmem:[%s1 + $0x18] sm:$0xff]
    %vm260 = vcmask 261120
    %v262 = vsel %vm260, %v254, 0
    %v265 = vsel %vm260, %v255, 0
    %267 = vmatprep.subr.mxu0 0.0
    %v268 = vand.u32 %v256, 4294901760
    %269 = vmatpush1.msra.mxu0 %v268
    %270 = vmatprep.subr.mxu0 0.0
    %v271 = vand.u32 %v257, 4294901760
    %272 = vmatpush1.msra.mxu0 %v271
    %273 = vmatprep.subr.mxu0 0.0
    %v274 = vand.u32 %v258, 4294901760
    %275 = vmatpush1.msra.mxu0 %v274
    %276 = vmatprep.subr.mxu0 0.0
    %v277 = vand.u32 %v259, 4294901760
    %278 = vmatpush1.msra.mxu0 %v277
    %279 = vmatprep.subr.mxu0 0.0
    %280 = vmatpush1.msra.mxu0 0.0
    %281 = vmatprep.subr.mxu0 0.0
    %282 = vmatpush1.msra.mxu0 0.0
    %283 = vmatprep.subr.mxu0 0.0
    %284 = vmatpush1.msra.mxu0 0.0
    %285 = vmatprep.subr.mxu0 0.0
    %286 = vmatpush1.msra.mxu0 0.0
    %287 = vmatprep.subr.mxu0 0.0
    %288 = vmatpush1.msra.mxu0 0.0
    %289 = vmatprep.subr.mxu0 0.0
    %290 = vmatpush1.msra.mxu0 0.0
    %291 = vmatprep.subr.mxu0 0.0
    %292 = vmatpush1.msra.mxu0 0.0
    %293 = vmatprep.subr.mxu0 0.0
    %294 = vmatpush1.msra.mxu0 0.0
    %295 = vmatprep.subr.mxu0 0.0
    %296 = vmatpush1.msra.mxu0 0.0
    %297 = vmatprep.subr.mxu0 0.0
    %298 = vmatpush1.msra.mxu0 0.0
    %299 = vmatprep.subr.mxu0 0.0
    %300 = vmatpush1.msra.mxu0 0.0
    %301 = vmatprep.subr.mxu0 0.0
    %302 = vmatpush1.msra.mxu0 0.0
    %303 = vmatprep.subr.mxu0 0.0
    %304 = vmatpush1.msra.mxu0 0.0
    %305 = vmatprep.subr.mxu0 0.0
    %306 = vmatpush1.msra.mxu0 0.0
    %307 = vmatprep.subr.mxu0 0.0
    %308 = vmatpush1.msra.mxu0 0.0
    %309 = vmatprep.subr.mxu0 0.0
    %310 = vmatpush1.msra.mxu0 0.0
    %311 = vmatprep.subr.mxu0 0.0
    %312 = vmatpush1.msra.mxu0 0.0
    %313 = vmatprep.subr.mxu0 0.0
    %314 = vmatpush1.msra.mxu0 0.0
    %315 = vmatprep.subr.mxu0 0.0
    %316 = vmatpush1.msra.mxu0 0.0
    %317 = vmatprep.subr.mxu0 0.0
    %318 = vmatpush1.msra.mxu0 0.0
    %319 = vmatprep.subr.mxu0 0.0
    %320 = vmatpush1.msra.mxu0 0.0
    %321 = vmatprep.subr.mxu0 0.0
    %322 = vmatpush1.msra.mxu0 0.0
    %323 = vmatprep.subr.mxu0 0.0
    %324 = vmatpush1.msra.mxu0 0.0
    %325 = vmatprep.subr.mxu0 0.0
    %326 = vmatpush1.msra.mxu0 0.0
    %327 = vmatprep.subr.mxu0 0.0
    %328 = vmatpush1.msra.mxu0 0.0
    %329 = vmatprep.subr.mxu0 0.0
    %330 = vmatpush1.msra.mxu0 0.0
    %331 = vmatprep.subr.mxu0 0.0
    %332 = vmatpush1.msra.mxu0 0.0
    %333 = vmatprep.subr.mxu0 0.0
    %334 = vmatpush1.msra.mxu0 0.0
    %335 = vmatprep.mubr.f32.mxu0 0.0
    %v336 = vand.u32 %v262, 4294901760
    %v337 = vsub.f32 %v262, %v336
    %v338 = vand.u32 %v337, 4294901760
    %v339 = vsub.f32 %v337, %v338
    %v340 = vand.u32 %v339, 4294901760
    %341 = vmatmul.mubr.f32.gmra.mrb[0].mxu0 %v340
    %v342 = vpop.f32.mrb[0].mxu0
    %v343 = vadd.f32 0.0, %v342
    %v344 = vpop.f32.mrb[0].mxu0
    %345 = vmatprep.mubr.f32.mxu0 0.0
    %v346 = vand.u32 %v265, 4294901760
    %v347 = vsub.f32 %v265, %v346
    %v348 = vand.u32 %v347, 4294901760
    %v349 = vsub.f32 %v347, %v348
    %v350 = vand.u32 %v349, 4294901760
    %351 = vmatmul.mubr.f32.gmra.mrb[0].mxu0 %v350
    %v352 = vpop.f32.mrb[0].mxu0
    %v353 = vadd.f32 0.0, %v352
    %v354 = vpop.f32.mrb[0].mxu0
    %355 = vdwg.mxu0
    %356 = vmatprep.subr.mxu0 0.0
    %v357 = vand.u32 %v256, 4294901760
    %v358 = vsub.f32 %v256, %v357
    %v359 = vand.u32 %v358, 4294901760
    %v360 = vsub.f32 %v358, %v359
    %v361 = vand.u32 %v360, 4294901760
    %362 = vmatpush1.msra.mxu0 %v361
    %363 = vmatprep.subr.mxu0 0.0
    %v364 = vand.u32 %v257, 4294901760
    %v365 = vsub.f32 %v257, %v364
    %v366 = vand.u32 %v365, 4294901760
    %v367 = vsub.f32 %v365, %v366
    %v368 = vand.u32 %v367, 4294901760
    %369 = vmatpush1.msra.mxu0 %v368
    %370 = vmatprep.subr.mxu0 0.0
    %v371 = vand.u32 %v258, 4294901760
    %v372 = vsub.f32 %v258, %v371
    %v373 = vand.u32 %v372, 4294901760
    %v374 = vsub.f32 %v372, %v373
    %v375 = vand.u32 %v374, 4294901760
    %376 = vmatpush1.msra.mxu0 %v375
    %377 = vmatprep.subr.mxu0 0.0
    %v378 = vand.u32 %v259, 4294901760
    %v379 = vsub.f32 %v259, %v378
    %v380 = vand.u32 %v379, 4294901760
    %v381 = vsub.f32 %v379, %v380
    %v382 = vand.u32 %v381, 4294901760
    %383 = vmatpush1.msra.mxu0 %v382
    %384 = vmatprep.subr.mxu0 0.0
    %385 = vmatpush1.msra.mxu0 0.0
    %386 = vmatprep.subr.mxu0 0.0
    %387 = vmatpush1.msra.mxu0 0.0
    %388 = vmatprep.subr.mxu0 0.0
    %389 = vmatpush1.msra.mxu0 0.0
    %390 = vmatprep.subr.mxu0 0.0
    %391 = vmatpush1.msra.mxu0 0.0
    %392 = vmatprep.subr.mxu0 0.0
    %393 = vmatpush1.msra.mxu0 0.0
    %394 = vmatprep.subr.mxu0 0.0
    %395 = vmatpush1.msra.mxu0 0.0
    %396 = vmatprep.subr.mxu0 0.0
    %397 = vmatpush1.msra.mxu0 0.0
    %398 = vmatprep.subr.mxu0 0.0
    %399 = vmatpush1.msra.mxu0 0.0
    %400 = vmatprep.subr.mxu0 0.0
    %401 = vmatpush1.msra.mxu0 0.0
    %402 = vmatprep.subr.mxu0 0.0
    %403 = vmatpush1.msra.mxu0 0.0
    %404 = vmatprep.subr.mxu0 0.0
    %405 = vmatpush1.msra.mxu0 0.0
    %406 = vmatprep.subr.mxu0 0.0
    %407 = vmatpush1.msra.mxu0 0.0
    %408 = vmatprep.subr.mxu0 0.0
    %409 = vmatpush1.msra.mxu0 0.0
    %410 = vmatprep.subr.mxu0 0.0
    %411 = vmatpush1.msra.mxu0 0.0
    %412 = vmatprep.subr.mxu0 0.0
    %413 = vmatpush1.msra.mxu0 0.0
    %414 = vmatprep.subr.mxu0 0.0
    %415 = vmatpush1.msra.mxu0 0.0
    %416 = vmatprep.subr.mxu0 0.0
    %417 = vmatpush1.msra.mxu0 0.0
    %418 = vmatprep.subr.mxu0 0.0
    %419 = vmatpush1.msra.mxu0 0.0
    %420 = vmatprep.subr.mxu0 0.0
    %421 = vmatpush1.msra.mxu0 0.0
    %422 = vmatprep.subr.mxu0 0.0
    %423 = vmatpush1.msra.mxu0 0.0
    %424 = vmatprep.subr.mxu0 0.0
    %425 = vmatpush1.msra.mxu0 0.0
    %426 = vmatprep.subr.mxu0 0.0
    %427 = vmatpush1.msra.mxu0 0.0
    %428 = vmatprep.subr.mxu0 0.0
    %429 = vmatpush1.msra.mxu0 0.0
    %430 = vmatprep.subr.mxu0 0.0
    %431 = vmatpush1.msra.mxu0 0.0
    %432 = vmatprep.subr.mxu0 0.0
    %433 = vmatpush1.msra.mxu0 0.0
    %434 = vmatprep.subr.mxu0 0.0
    %435 = vmatpush1.msra.mxu0 0.0
    %436 = vmatprep.subr.mxu0 0.0
    %437 = vmatpush1.msra.mxu0 0.0
    %438 = vmatprep.subr.mxu0 0.0
    %439 = vmatpush1.msra.mxu0 0.0
    %440 = vmatprep.mubr.f32.mxu0 0.0
    %v441 = vand.u32 %v262, 4294901760
    %442 = vmatmul.mubr.f32.gmra.mrb[0].mxu0 %v441
    %v443 = vpop.f32.mrb[0].mxu0
    %v444 = vadd.f32 %v343, %v443
    %v445 = vpop.f32.mrb[0].mxu0
    %446 = vmatprep.mubr.f32.mxu0 0.0
    %v447 = vand.u32 %v265, 4294901760
    %448 = vmatmul.mubr.f32.gmra.mrb[0].mxu0 %v447
    %v449 = vpop.f32.mrb[0].mxu0
    %v450 = vadd.f32 %v353, %v449
    %v451 = vpop.f32.mrb[0].mxu0
    %452 = vdwg.mxu0
    %453 = vmatprep.subr.mxu0 0.0
    %v454 = vand.u32 %v256, 4294901760
    %v455 = vsub.f32 %v256, %v454
    %456 = vmatpush1.msra.mxu0 %v455
    %457 = vmatprep.subr.mxu0 0.0
    %v458 = vand.u32 %v257, 4294901760
    %v459 = vsub.f32 %v257, %v458
    %460 = vmatpush1.msra.mxu0 %v459
    %461 = vmatprep.subr.mxu0 0.0
    %v462 = vand.u32 %v258, 4294901760
    %v463 = vsub.f32 %v258, %v462
    %464 = vmatpush1.msra.mxu0 %v463
    %465 = vmatprep.subr.mxu0 0.0
    %v466 = vand.u32 %v259, 4294901760
    %v467 = vsub.f32 %v259, %v466
    %468 = vmatpush1.msra.mxu0 %v467
    %469 = vmatprep.subr.mxu0 0.0
    %470 = vmatpush1.msra.mxu0 0.0
    %471 = vmatprep.subr.mxu0 0.0
    %472 = vmatpush1.msra.mxu0 0.0
    %473 = vmatprep.subr.mxu0 0.0
    %474 = vmatpush1.msra.mxu0 0.0
    %475 = vmatprep.subr.mxu0 0.0
    %476 = vmatpush1.msra.mxu0 0.0
    %477 = vmatprep.subr.mxu0 0.0
    %478 = vmatpush1.msra.mxu0 0.0
    %479 = vmatprep.subr.mxu0 0.0
    %480 = vmatpush1.msra.mxu0 0.0
    %481 = vmatprep.subr.mxu0 0.0
    %482 = vmatpush1.msra.mxu0 0.0
    %483 = vmatprep.subr.mxu0 0.0
    %484 = vmatpush1.msra.mxu0 0.0
    %485 = vmatprep.subr.mxu0 0.0
    %486 = vmatpush1.msra.mxu0 0.0
    %487 = vmatprep.subr.mxu0 0.0
    %488 = vmatpush1.msra.mxu0 0.0
    %489 = vmatprep.subr.mxu0 0.0
    %490 = vmatpush1.msra.mxu0 0.0
    %491 = vmatprep.subr.mxu0 0.0
    %492 = vmatpush1.msra.mxu0 0.0
    %493 = vmatprep.subr.mxu0 0.0
    %494 = vmatpush1.msra.mxu0 0.0
    %495 = vmatprep.subr.mxu0 0.0
    %496 = vmatpush1.msra.mxu0 0.0
    %497 = vmatprep.subr.mxu0 0.0
    %498 = vmatpush1.msra.mxu0 0.0
    %499 = vmatprep.subr.mxu0 0.0
    %500 = vmatpush1.msra.mxu0 0.0
    %501 = vmatprep.subr.mxu0 0.0
    %502 = vmatpush1.msra.mxu0 0.0
    %503 = vmatprep.subr.mxu0 0.0
    %504 = vmatpush1.msra.mxu0 0.0
    %505 = vmatprep.subr.mxu0 0.0
    %506 = vmatpush1.msra.mxu0 0.0
    %507 = vmatprep.subr.mxu0 0.0
    %508 = vmatpush1.msra.mxu0 0.0
    %509 = vmatprep.subr.mxu0 0.0
    %510 = vmatpush1.msra.mxu0 0.0
    %511 = vmatprep.subr.mxu0 0.0
    %512 = vmatpush1.msra.mxu0 0.0
    %513 = vmatprep.subr.mxu0 0.0
    %514 = vmatpush1.msra.mxu0 0.0
    %515 = vmatprep.subr.mxu0 0.0
    %516 = vmatpush1.msra.mxu0 0.0
    %517 = vmatprep.subr.mxu0 0.0
    %518 = vmatpush1.msra.mxu0 0.0
    %519 = vmatprep.subr.mxu0 0.0
    %520 = vmatpush1.msra.mxu0 0.0
    %521 = vmatprep.subr.mxu0 0.0
    %522 = vmatpush1.msra.mxu0 0.0
    %523 = vmatprep.subr.mxu0 0.0
    %524 = vmatpush1.msra.mxu0 0.0
    %525 = vmatprep.mubr.f32.mxu0 0.0
    %v526 = vand.u32 %v262, 4294901760
    %v527 = vsub.f32 %v262, %v526
    %528 = vmatmul.mubr.f32.gmra.mrb[0].mxu0 %v527
    %v529 = vpop.f32.mrb[0].mxu0
    %v530 = vadd.f32 %v444, %v529
    %v531 = vpop.f32.mrb[0].mxu0
    %532 = vmatprep.mubr.f32.mxu0 0.0
    %v533 = vand.u32 %v265, 4294901760
    %v534 = vsub.f32 %v265, %v533
    %535 = vmatmul.mubr.f32.gmra.mrb[0].mxu0 %v534
    %v536 = vpop.f32.mrb[0].mxu0
    %v537 = vadd.f32 %v450, %v536
    %v538 = vpop.f32.mrb[0].mxu0
    %539 = vdwg.mxu0
    %540 = vmatprep.subr.mxu0 0.0
    %v541 = vand.u32 %v256, 4294901760
    %542 = vmatpush1.msra.mxu0 %v541
    %543 = vmatprep.subr.mxu0 0.0
    %v544 = vand.u32 %v257, 4294901760
    %545 = vmatpush1.msra.mxu0 %v544
    %546 = vmatprep.subr.mxu0 0.0
    %v547 = vand.u32 %v258, 4294901760
    %548 = vmatpush1.msra.mxu0 %v547
    %549 = vmatprep.subr.mxu0 0.0
    %v550 = vand.u32 %v259, 4294901760
    %551 = vmatpush1.msra.mxu0 %v550
    %552 = vmatprep.subr.mxu0 0.0
    %553 = vmatpush1.msra.mxu0 0.0
    %554 = vmatprep.subr.mxu0 0.0
    %555 = vmatpush1.msra.mxu0 0.0
    %556 = vmatprep.subr.mxu0 0.0
    %557 = vmatpush1.msra.mxu0 0.0
    %558 = vmatprep.subr.mxu0 0.0
    %559 = vmatpush1.msra.mxu0 0.0
    %560 = vmatprep.subr.mxu0 0.0
    %561 = vmatpush1.msra.mxu0 0.0
    %562 = vmatprep.subr.mxu0 0.0
    %563 = vmatpush1.msra.mxu0 0.0
    %564 = vmatprep.subr.mxu0 0.0
    %565 = vmatpush1.msra.mxu0 0.0
    %566 = vmatprep.subr.mxu0 0.0
    %567 = vmatpush1.msra.mxu0 0.0
    %568 = vmatprep.subr.mxu0 0.0
    %569 = vmatpush1.msra.mxu0 0.0
    %570 = vmatprep.subr.mxu0 0.0
    %571 = vmatpush1.msra.mxu0 0.0
    %572 = vmatprep.subr.mxu0 0.0
    %573 = vmatpush1.msra.mxu0 0.0
    %574 = vmatprep.subr.mxu0 0.0
    %575 = vmatpush1.msra.mxu0 0.0
    %576 = vmatprep.subr.mxu0 0.0
    %577 = vmatpush1.msra.mxu0 0.0
    %578 = vmatprep.subr.mxu0 0.0
    %579 = vmatpush1.msra.mxu0 0.0
    %580 = vmatprep.subr.mxu0 0.0
    %581 = vmatpush1.msra.mxu0 0.0
    %582 = vmatprep.subr.mxu0 0.0
    %583 = vmatpush1.msra.mxu0 0.0
    %584 = vmatprep.subr.mxu0 0.0
    %585 = vmatpush1.msra.mxu0 0.0
    %586 = vmatprep.subr.mxu0 0.0
    %587 = vmatpush1.msra.mxu0 0.0
    %588 = vmatprep.subr.mxu0 0.0
    %589 = vmatpush1.msra.mxu0 0.0
    %590 = vmatprep.subr.mxu0 0.0
    %591 = vmatpush1.msra.mxu0 0.0
    %592 = vmatprep.subr.mxu0 0.0
    %593 = vmatpush1.msra.mxu0 0.0
    %594 = vmatprep.subr.mxu0 0.0
    %595 = vmatpush1.msra.mxu0 0.0
    %596 = vmatprep.subr.mxu0 0.0
    %597 = vmatpush1.msra.mxu0 0.0
    %598 = vmatprep.subr.mxu0 0.0
    %599 = vmatpush1.msra.mxu0 0.0
    %600 = vmatprep.subr.mxu0 0.0
    %601 = vmatpush1.msra.mxu0 0.0
    %602 = vmatprep.subr.mxu0 0.0
    %603 = vmatpush1.msra.mxu0 0.0
    %604 = vmatprep.subr.mxu0 0.0
    %605 = vmatpush1.msra.mxu0 0.0
    %606 = vmatprep.subr.mxu0 0.0
    %607 = vmatpush1.msra.mxu0 0.0
    %608 = vmatprep.mubr.f32.mxu0 0.0
    %v609 = vand.u32 %v262, 4294901760
    %v610 = vsub.f32 %v262, %v609
    %v611 = vand.u32 %v610, 4294901760
    %612 = vmatmul.mubr.f32.gmra.mrb[0].mxu0 %v611
    %v613 = vpop.f32.mrb[0].mxu0
    %v614 = vadd.f32 %v530, %v613
    %v615 = vpop.f32.mrb[0].mxu0
    %616 = vmatprep.mubr.f32.mxu0 0.0
    %v617 = vand.u32 %v265, 4294901760
    %v618 = vsub.f32 %v265, %v617
    %v619 = vand.u32 %v618, 4294901760
    %620 = vmatmul.mubr.f32.gmra.mrb[0].mxu0 %v619
    %v621 = vpop.f32.mrb[0].mxu0
    %v622 = vadd.f32 %v537, %v621
    %v623 = vpop.f32.mrb[0].mxu0
    %624 = vdwg.mxu0
    %625 = vmatprep.subr.mxu0 0.0
    %v626 = vand.u32 %v256, 4294901760
    %v627 = vsub.f32 %v256, %v626
    %v628 = vand.u32 %v627, 4294901760
    %629 = vmatpush1.msra.mxu0 %v628
    %630 = vmatprep.subr.mxu0 0.0
    %v631 = vand.u32 %v257, 4294901760
    %v632 = vsub.f32 %v257, %v631
    %v633 = vand.u32 %v632, 4294901760
    %634 = vmatpush1.msra.mxu0 %v633
    %635 = vmatprep.subr.mxu0 0.0
    %v636 = vand.u32 %v258, 4294901760
    %v637 = vsub.f32 %v258, %v636
    %v638 = vand.u32 %v637, 4294901760
    %639 = vmatpush1.msra.mxu0 %v638
    %640 = vmatprep.subr.mxu0 0.0
    %v641 = vand.u32 %v259, 4294901760
    %v642 = vsub.f32 %v259, %v641
    %v643 = vand.u32 %v642, 4294901760
    %644 = vmatpush1.msra.mxu0 %v643
    %645 = vmatprep.subr.mxu0 0.0
    %646 = vmatpush1.msra.mxu0 0.0
    %647 = vmatprep.subr.mxu0 0.0
    %648 = vmatpush1.msra.mxu0 0.0
    %649 = vmatprep.subr.mxu0 0.0
    %650 = vmatpush1.msra.mxu0 0.0
    %651 = vmatprep.subr.mxu0 0.0
    %652 = vmatpush1.msra.mxu0 0.0
    %653 = vmatprep.subr.mxu0 0.0
    %654 = vmatpush1.msra.mxu0 0.0
    %655 = vmatprep.subr.mxu0 0.0
    %656 = vmatpush1.msra.mxu0 0.0
    %657 = vmatprep.subr.mxu0 0.0
    %658 = vmatpush1.msra.mxu0 0.0
    %659 = vmatprep.subr.mxu0 0.0
    %660 = vmatpush1.msra.mxu0 0.0
    %661 = vmatprep.subr.mxu0 0.0
    %662 = vmatpush1.msra.mxu0 0.0
    %663 = vmatprep.subr.mxu0 0.0
    %664 = vmatpush1.msra.mxu0 0.0
    %665 = vmatprep.subr.mxu0 0.0
    %666 = vmatpush1.msra.mxu0 0.0
    %667 = vmatprep.subr.mxu0 0.0
    %668 = vmatpush1.msra.mxu0 0.0
    %669 = vmatprep.subr.mxu0 0.0
    %670 = vmatpush1.msra.mxu0 0.0
    %671 = vmatprep.subr.mxu0 0.0
    %672 = vmatpush1.msra.mxu0 0.0
    %673 = vmatprep.subr.mxu0 0.0
    %674 = vmatpush1.msra.mxu0 0.0
    %675 = vmatprep.subr.mxu0 0.0
    %676 = vmatpush1.msra.mxu0 0.0
    %677 = vmatprep.subr.mxu0 0.0
    %678 = vmatpush1.msra.mxu0 0.0
    %679 = vmatprep.subr.mxu0 0.0
    %680 = vmatpush1.msra.mxu0 0.0
    %681 = vmatprep.subr.mxu0 0.0
    %682 = vmatpush1.msra.mxu0 0.0
    %683 = vmatprep.subr.mxu0 0.0
    %684 = vmatpush1.msra.mxu0 0.0
    %685 = vmatprep.subr.mxu0 0.0
    %686 = vmatpush1.msra.mxu0 0.0
    %687 = vmatprep.subr.mxu0 0.0
    %688 = vmatpush1.msra.mxu0 0.0
    %689 = vmatprep.subr.mxu0 0.0
    %690 = vmatpush1.msra.mxu0 0.0
    %691 = vmatprep.subr.mxu0 0.0
    %692 = vmatpush1.msra.mxu0 0.0
    %693 = vmatprep.subr.mxu0 0.0
    %694 = vmatpush1.msra.mxu0 0.0
    %695 = vmatprep.subr.mxu0 0.0
    %696 = vmatpush1.msra.mxu0 0.0
    %697 = vmatprep.subr.mxu0 0.0
    %698 = vmatpush1.msra.mxu0 0.0
    %699 = vmatprep.subr.mxu0 0.0
    %700 = vmatpush1.msra.mxu0 0.0
    %701 = vmatprep.mubr.f32.mxu0 0.0
    %v702 = vand.u32 %v262, 4294901760
    %703 = vmatmul.mubr.f32.gmra.mrb[0].mxu0 %v702
    %v704 = vpop.f32.mrb[0].mxu0
    %v705 = vadd.f32 %v614, %v704
    %v706 = vpop.f32.mrb[0].mxu0
    %707 = vmatprep.mubr.f32.mxu0 0.0
    %v708 = vand.u32 %v265, 4294901760
    %709 = vmatmul.mubr.f32.gmra.mrb[0].mxu0 %v708
    %v710 = vpop.f32.mrb[0].mxu0
    %v711 = vadd.f32 %v622, %v710
    %v712 = vpop.f32.mrb[0].mxu0
    %713 = vdwg.mxu0
    %714 = vmatprep.subr.mxu0 0.0
    %v715 = vand.u32 %v256, 4294901760
    %716 = vmatpush1.msra.mxu0 %v715
    %717 = vmatprep.subr.mxu0 0.0
    %v718 = vand.u32 %v257, 4294901760
    %719 = vmatpush1.msra.mxu0 %v718
    %720 = vmatprep.subr.mxu0 0.0
    %v721 = vand.u32 %v258, 4294901760
    %722 = vmatpush1.msra.mxu0 %v721
    %723 = vmatprep.subr.mxu0 0.0
    %v724 = vand.u32 %v259, 4294901760
    %725 = vmatpush1.msra.mxu0 %v724
    %726 = vmatprep.subr.mxu0 0.0
    %727 = vmatpush1.msra.mxu0 0.0
    %728 = vmatprep.subr.mxu0 0.0
    %729 = vmatpush1.msra.mxu0 0.0
    %730 = vmatprep.subr.mxu0 0.0
    %731 = vmatpush1.msra.mxu0 0.0
    %732 = vmatprep.subr.mxu0 0.0
    %733 = vmatpush1.msra.mxu0 0.0
    %734 = vmatprep.subr.mxu0 0.0
    %735 = vmatpush1.msra.mxu0 0.0
    %736 = vmatprep.subr.mxu0 0.0
    %737 = vmatpush1.msra.mxu0 0.0
    %738 = vmatprep.subr.mxu0 0.0
    %739 = vmatpush1.msra.mxu0 0.0
    %740 = vmatprep.subr.mxu0 0.0
    %741 = vmatpush1.msra.mxu0 0.0
    %742 = vmatprep.subr.mxu0 0.0
    %743 = vmatpush1.msra.mxu0 0.0
    %744 = vmatprep.subr.mxu0 0.0
    %745 = vmatpush1.msra.mxu0 0.0
    %746 = vmatprep.subr.mxu0 0.0
    %747 = vmatpush1.msra.mxu0 0.0
    %748 = vmatprep.subr.mxu0 0.0
    %749 = vmatpush1.msra.mxu0 0.0
    %750 = vmatprep.subr.mxu0 0.0
    %751 = vmatpush1.msra.mxu0 0.0
    %752 = vmatprep.subr.mxu0 0.0
    %753 = vmatpush1.msra.mxu0 0.0
    %754 = vmatprep.subr.mxu0 0.0
    %755 = vmatpush1.msra.mxu0 0.0
    %756 = vmatprep.subr.mxu0 0.0
    %757 = vmatpush1.msra.mxu0 0.0
    %758 = vmatprep.subr.mxu0 0.0
    %759 = vmatpush1.msra.mxu0 0.0
    %760 = vmatprep.subr.mxu0 0.0
    %761 = vmatpush1.msra.mxu0 0.0
    %762 = vmatprep.subr.mxu0 0.0
    %763 = vmatpush1.msra.mxu0 0.0
    %764 = vmatprep.subr.mxu0 0.0
    %765 = vmatpush1.msra.mxu0 0.0
    %766 = vmatprep.subr.mxu0 0.0
    %767 = vmatpush1.msra.mxu0 0.0
    %768 = vmatprep.subr.mxu0 0.0
    %769 = vmatpush1.msra.mxu0 0.0
    %770 = vmatprep.subr.mxu0 0.0
    %771 = vmatpush1.msra.mxu0 0.0
    %772 = vmatprep.subr.mxu0 0.0
    %773 = vmatpush1.msra.mxu0 0.0
    %774 = vmatprep.subr.mxu0 0.0
    %775 = vmatpush1.msra.mxu0 0.0
    %776 = vmatprep.subr.mxu0 0.0
    %777 = vmatpush1.msra.mxu0 0.0
    %778 = vmatprep.subr.mxu0 0.0
    %779 = vmatpush1.msra.mxu0 0.0
    %780 = vmatprep.subr.mxu0 0.0
    %781 = vmatpush1.msra.mxu0 0.0
    %782 = vmatprep.mubr.f32.mxu0 0.0
    %v783 = vand.u32 %v262, 4294901760
    %784 = vmatmul.mubr.f32.gmra.mrb[0].mxu0 %v783
    %v785 = vpop.f32.mrb[0].mxu0
    %v786 = vadd.f32 %v705, %v785
    %v787 = vpop.f32.mrb[0].mxu0
    %788 = vmatprep.mubr.f32.mxu0 0.0
    %v789 = vand.u32 %v265, 4294901760
    %790 = vmatmul.mubr.f32.gmra.mrb[0].mxu0 %v789
    %v791 = vpop.f32.mrb[0].mxu0
    %v792 = vadd.f32 %v711, %v791
    %v793 = vpop.f32.mrb[0].mxu0
    %794 = vdwg.mxu0
    %vm795 = vcmask 195584
    %796 = vst.msk [vmem:[#allocation2] sm:$0xff] %vm795, %v786
    %797 = vst.msk [vmem:[#allocation2 + $0x8] sm:$0xff] %vm795, %v792
    // Predicated region
    $region10: #{tpu_custom_call.1} parent=1 // pred_check
      _
    $region11: #{tpu_custom_call.1} parent=1 // pred_check_branch
      %799 = sbr.rel (0) target = $region13
    $region12: #{tpu_custom_call.1} parent=1 // pred_region
      %s801 = ssub.s32 256, 256
      %802 = vsyncadd [#allocation3], %s801
      %s803 = sshll.u32 [#allocation2], 4
      %s804 = int_to_ptr.vmem [resolvable:$true] %s803
      %809 = dma.vmem_to_hbm [thread:$0]  %s804, 256, %s2, [#allocation3], 128, 128, 8
    $region13: #{tpu_custom_call.1} parent=1 // pred_fallthru
      _
    // Predicated region
    $region14: #{tpu_custom_call.1} parent=1 // pred_check
      _
    $region15: #{tpu_custom_call.1} parent=1 // pred_check_branch
      %811 = sbr.rel (0) target = $region17
    $region16: #{tpu_custom_call.1} parent=1 // pred_region
      %812 = dma.done [#allocation3], 256
    $region17: #{tpu_custom_call.1} parent=1 // pred_fallthru
      _
    %813 = vsyncpa [#allocation3], 1

</llo_original>
